<compile_context>
chip_gen: v6e
topology: v6e:2x2x1
jax: 0.10.0
libtpu: 0.0.40
codegen_flags: <defaults>
</compile_context>

<pallas_src>
import functools

import jax
import jax.numpy as jnp
from jax.experimental import pallas as pl
from jax.experimental.pallas import tpu as pltpu


def rmsnorm_kernel(x_ref, w_ref, o_ref, *, eps):
    # x_ref: (TM, D) tile of rows; w_ref: (1, D) weight row (VPU broadcast).
    x = x_ref[...].astype(jnp.float32)                         # x.float()
    ms = jnp.mean(x * x, axis=-1, keepdims=True)               # pow(2).mean(-1, keepdim=True)
    normed = x * jax.lax.rsqrt(ms + eps)                       # x * rsqrt(... + eps)
    normed = normed.astype(x_ref.dtype)                        # .type_as(x)
    out = normed.astype(jnp.float32) * w_ref[...].astype(jnp.float32)  # * self.weight
    o_ref[...] = out.astype(o_ref.dtype)


def _tpu_budgets():
    """Per-generation VMEM capacity and TensorCore count (conservative
    fallbacks if the query is unavailable)."""
    vmem_bytes = 64 * 1024 * 1024   # v7x physical per-TC VMEM (smallest case)
    num_cores = 1
    try:
        info = pltpu.get_tpu_info()
        vmem_bytes = int(getattr(info, "vmem_capacity_bytes", vmem_bytes))
        for attr in ("num_cores", "core_count", "tensorcores_per_chip"):
            v = getattr(info, attr, None)
            if v:
                num_cores = int(v)
                break
    except Exception:
        pass
    if num_cores == 1:
        try:
            d = jax.devices()[0]
            v = getattr(d, "num_cores", None)
            if v:
                num_cores = int(v)
        except Exception:
            pass
    return max(vmem_bytes, 16 * 1024 * 1024), max(num_cores, 1)


def _sublane_multiple(x_bytes, o_bytes):
    # 4B -> 8 rows, 2B -> 16 rows, 1B -> 32 rows; use the stricter of in/out.
    def m(b):
        return max(8, 32 // max(int(b), 1))
    return max(m(x_bytes), m(o_bytes))


def _choose_tile_rows(rows, dim, x_bytes, o_bytes, vmem_bytes, num_cores):
    """Row tile: as large as a conservative VMEM budget allows (multi-MiB
    regime), multiple of the dtype's packed sublane count, and — on multi-core
    parts with enough work — at least 2 blocks per TensorCore."""
    sub = _sublane_multiple(x_bytes, o_bytes)
    if rows <= sub:
        return rows  # single full block (block == full array dims is legal)

    # VMEM per tile row: double-buffered input + output tiles, plus roughly
    # two rows worth of f32 intermediates (upcast x / x*x / normed).
    per_row_vmem = dim * (2 * x_bytes + 2 * o_bytes + 2 * 4)
    budget = vmem_bytes // 4
    t = budget // max(per_row_vmem, 1)
    t = max(sub, min(8192, (t // sub) * sub))

    rows_rounded = ((rows + sub - 1) // sub) * sub
    t = min(t, rows_rounded)

    # Multi-core (v7x): aim for >= 2 blocks per core so each core's pipeline
    # can overlap DMA with compute — but only if there's enough I/O to
    # amortize the per-step overhead (>= ~1 MiB per block).
    if num_cores > 1:
        target_blocks = 2 * num_cores
        total_io = rows * dim * (x_bytes + o_bytes)
        if total_io >= target_blocks * (1 << 20) and pl.cdiv(rows, t) < target_blocks:
            t_new = -(-rows // target_blocks)                    # ceil
            t = max(sub, ((t_new + sub - 1) // sub) * sub)
            t = min(t, rows_rounded)
    return t


def rmsnorm(x, weight, eps=1e-5, *, out_dtype=None, tile_rows=None,
            vmem_limit_bytes=None):
    """x: [..., dim]; weight: [dim]. Returns same shape as x.

    out_dtype=None keeps strict PyTorch promotion ((normed.type_as(x)) *
    float32 weight -> promoted dtype). Pass out_dtype=x.dtype (e.g. bf16) to
    halve HBM write traffic when the downstream consumer accepts it.
    """
    orig_shape = x.shape
    dim = orig_shape[-1]
    rows = 1
    for s in orig_shape[:-1]:
        rows *= s
    x2d = x.reshape(rows, dim)
    w2d = weight.reshape(1, dim)

    if out_dtype is None:
        out_dtype = jnp.promote_types(x.dtype, weight.dtype)
    x_bytes = jnp.dtype(x.dtype).itemsize
    o_bytes = jnp.dtype(out_dtype).itemsize
    w_bytes = jnp.dtype(weight.dtype).itemsize

    vmem_bytes, num_cores = _tpu_budgets()
    if vmem_limit_bytes is None:
        vmem_limit_bytes = int(0.75 * vmem_bytes)
    if tile_rows is None:
        tile_rows = _choose_tile_rows(rows, dim, x_bytes, o_bytes,
                                      vmem_bytes, num_cores)

    grid = (pl.cdiv(rows, tile_rows),)

    cost = pl.CostEstimate(
        flops=3 * rows * dim,
        transcendentals=rows,
        bytes_accessed=rows * dim * (x_bytes + o_bytes) + dim * w_bytes,
    )

    # TODO(synk): if a target model ever uses dim % 128 != 0 at large scale,
    # consider padding the feature dim to a lane multiple (with sum/dim and a
    # zero-padded weight) to avoid masked partial stores; a no-op for the
    # usual 128-aligned hidden sizes, so not done here.
    out = pl.pallas_call(
        functools.partial(rmsnorm_kernel, eps=eps),
        out_shape=jax.ShapeDtypeStruct((rows, dim), out_dtype),
        grid_spec=pltpu.PrefetchScalarGridSpec(
            num_scalar_prefetch=0,
            grid=grid,
            in_specs=[
                pl.BlockSpec((tile_rows, dim), lambda i: (i, 0)),
                # Constant index_map: weight stays resident, not re-DMA'd.
                pl.BlockSpec((1, dim), lambda i: (0, 0)),
            ],
            out_specs=pl.BlockSpec((tile_rows, dim), lambda i: (i, 0)),
        ),
        compiler_params=pltpu.CompilerParams(
            dimension_semantics=("parallel",),
            vmem_limit_bytes=vmem_limit_bytes,
        ),
        cost_estimate=cost,
    )(x2d, w2d)

    return out.reshape(orig_shape[:-1] + (dim,))


def rmsnorm_ref(x, weight, eps=1e-5):
    xf = x.astype(jnp.float32)
    normed = xf * jax.lax.rsqrt(jnp.mean(xf * xf, axis=-1, keepdims=True) + eps)
    normed = normed.astype(x.dtype)
    return normed.astype(jnp.float32) * weight.astype(jnp.float32)


if __name__ == "__main__":
    key = jax.random.PRNGKey(0)

    # Primary check: matches the module's forward (batch=2, seq=8, hidden=32).
    batch, seq, hidden = 2, 8, 32
    x = jax.random.normal(key, (batch, seq, hidden), dtype=jnp.float32)
    weight = jnp.ones((hidden,), dtype=jnp.float32)  # nn.Parameter(torch.ones(dim))

    out = rmsnorm(x, weight, eps=1e-5)
    out = jax.block_until_ready(out)
    ref = rmsnorm_ref(x, weight, eps=1e-5)
    assert out.shape == x.shape, (out.shape, x.shape)
    assert jnp.allclose(out, ref, atol=1e-5, rtol=1e-5), "mismatch vs reference"

    # Ragged-rows check (rows not a multiple of the tile granularity):
    # exercises the pad-free cdiv grid path with a partial last block.
    key2 = jax.random.PRNGKey(1)
    x2 = jax.random.normal(key2, (3, 5, hidden), dtype=jnp.float32)  # rows=15
    out2 = jax.block_until_ready(rmsnorm(x2, weight, eps=1e-5))
    ref2 = rmsnorm_ref(x2, weight, eps=1e-5)
    assert out2.shape == x2.shape
    assert jnp.allclose(out2, ref2, atol=1e-5, rtol=1e-5), "ragged mismatch"

    # bf16 activations with the reduced-HBM output path (out_dtype=x.dtype).
    x3 = jax.random.normal(jax.random.PRNGKey(2), (4, 8, hidden),
                           dtype=jnp.bfloat16)
    out3 = jax.block_until_ready(rmsnorm(x3, weight, eps=1e-5,
                                         out_dtype=jnp.bfloat16))
    ref3 = rmsnorm_ref(x3, weight, eps=1e-5).astype(jnp.bfloat16)
    assert out3.dtype == jnp.bfloat16
    assert jnp.allclose(out3.astype(jnp.float32), ref3.astype(jnp.float32),
                        atol=2e-2, rtol=2e-2), "bf16 mismatch"

    print("KERNEL_OK")
</pallas_src>

<mosaic_0001>
module attributes {stable_mosaic.version = 11 : i64} {
  func.func @rmsnorm_kernel(%arg0: i32, %arg1: memref<16x32xf32, #tpu.memory_space<vmem>>, %arg2: memref<1x32xf32, #tpu.memory_space<vmem>>, %arg3: memref<16x32xf32, #tpu.memory_space<vmem>>) attributes {dimension_semantics = [#tpu.dimension_semantics<parallel>], iteration_bounds = array<i64: 1>, scalar_prefetch = 0 : i64, scratch_operands = 0 : i64, tpu.core_type = #tpu.core_type<tc>, window_params = [{transform_indices = @transform_0, window_bounds = array<i64: 16, 32>}, {pipeline_mode = #tpu.pipeline_mode<synchronous>, transform_indices = @transform_1, window_bounds = array<i64: 1, 32>}, {transform_indices = @transform_2, window_bounds = array<i64: 16, 32>}]} {
    %c0 = arith.constant 0 : index
    %c0_0 = arith.constant 0 : index
    %0 = vector.load %arg1[%c0, %c0_0] : memref<16x32xf32, #tpu.memory_space<vmem>>, vector<16x32xf32>
    %1 = arith.mulf %0, %0 : vector<16x32xf32>
    %cst = arith.constant dense<0.000000e+00> : vector<16xf32>
    %2 = vector.multi_reduction <add>, %1, %cst [1] : vector<16x32xf32> to vector<16xf32>
    %3 = vector.shape_cast %2 : vector<16xf32> to vector<16x1xf32>
    %cst_1 = arith.constant 3.200000e+01 : f32
    %4 = vector.broadcast %cst_1 : f32 to vector<16x1xf32>
    %5 = arith.divf %3, %4 : vector<16x1xf32>
    %cst_2 = arith.constant 9.99999974E-6 : f32
    %6 = vector.broadcast %cst_2 : f32 to vector<16x1xf32>
    %7 = arith.addf %5, %6 : vector<16x1xf32>
    %8 = math.rsqrt %7 : vector<16x1xf32>
    %9 = vector.broadcast %8 : vector<16x1xf32> to vector<16x32xf32>
    %10 = arith.mulf %0, %9 : vector<16x32xf32>
    %c0_3 = arith.constant 0 : index
    %c0_4 = arith.constant 0 : index
    %11 = vector.load %arg2[%c0_3, %c0_4] : memref<1x32xf32, #tpu.memory_space<vmem>>, vector<1x32xf32>
    %12 = vector.broadcast %11 : vector<1x32xf32> to vector<16x32xf32>
    %13 = arith.mulf %10, %12 : vector<16x32xf32>
    %c0_5 = arith.constant 0 : index
    %c0_6 = arith.constant 0 : index
    %14 = vector.load %arg3[%c0_5, %c0_6] : memref<16x32xf32, #tpu.memory_space<vmem>>, vector<16x32xf32>
    tpu.vector_store %arg3[%c0_5, %c0_6], %13 {strides = array<i32>} : memref<16x32xf32, #tpu.memory_space<vmem>>, vector<16x32xf32>,
    return
  }
  func.func @transform_0(%arg0: i32) -> (i32, i32) {
    %c0_i32 = arith.constant 0 : i32
    %c0_i32_0 = arith.constant 0 : i32
    return %arg0, %c0_i32 : i32, i32
  }
  func.func @transform_1(%arg0: i32) -> (i32, i32) {
    %c0_i32 = arith.constant 0 : i32
    %c0_i32_0 = arith.constant 0 : i32
    %c0_i32_1 = arith.constant 0 : i32
    return %c0_i32, %c0_i32_0 : i32, i32
  }
  func.func @transform_2(%arg0: i32) -> (i32, i32) {
    %c0_i32 = arith.constant 0 : i32
    %c0_i32_0 = arith.constant 0 : i32
    return %arg0, %c0_i32 : i32, i32
  }
}

</mosaic_0001>

<llo_original>
// kernel: tpu_custom_call.1
$region0: #{tpu_custom_call.1}
  #allocation0 [shape = 'u32[]', space=smem, size = 0x4, offset = 0x4, fixed_abs, tag = 'smem constant byte address 0x4 - core index']
  #allocation1 [shape = 'u32[144,128]{1,0:T(1,128)}', space=vmem, size = 0x12000, scoped, tag = 'internal scratch']
  %s0 = inlined_call_operand.hbm [shape: f32[16,32], index: 0, kind: input, shape index: {}]
  %s1 = inlined_call_operand.vmem [shape: f32[1,32], index: 1, kind: input, shape index: {}]
  %s2 = inlined_call_operand.hbm [shape: f32[16,32], index: 2, kind: output, shape index: {}]
  %s3 = sld [smem:[#allocation0]]
  $region22: #{tpu_custom_call.1} parent=0
    _
  %s5 = ssub.s32 1, %s3
  %s6 = scalar_select 0, %s5, %s3
  $region1: #{tpu_custom_call.1} parent=0
    #allocation2 [shape = 'u8[8192]{0}', space=vmem, size = 0x2000, scoped, tag = 'input window, operand 0, single buffered']
    #allocation3 [shape = 's32[1]{0}', space=sflag, size = 0x4, scoped, tag = 'scoped memory for tpu_custom_call.1']
    #allocation4 [shape = 's32[1]{0}', space=sflag, size = 0x4, scoped, tag = 'scoped memory for tpu_custom_call.1']
    #allocation5 [shape = 'u8[8192]{0}', space=vmem, size = 0x2000, scoped, tag = 'output window, operand 0, single buffered']
    %7 = vsyncpa [#allocation3], 0
    %8 = vsyncpa [#allocation4], 0
    // Predicated region
    $region2: #{tpu_custom_call.1} parent=1 // pred_check
      _
    $region3: #{tpu_custom_call.1} parent=1 // pred_check_branch
      %10 = sbr.rel (0) target = $region5
    $region4: #{tpu_custom_call.1} parent=1 // pred_region
      %s12 = ssub.s32 256, 256
      %13 = vsyncadd [#allocation3], %s12
      %s14 = sshll.u32 [#allocation2], 4
      %s15 = int_to_ptr.vmem [resolvable:$true] %s14
      %20 = dma.hbm_to_vmem [thread:$0]  %s0, 256, %s15, [#allocation3], 128, 128, 8
    $region5: #{tpu_custom_call.1} parent=1 // pred_fallthru
      _
    // Predicated region
    $region6: #{tpu_custom_call.1} parent=1 // pred_check
      _
    $region7: #{tpu_custom_call.1} parent=1 // pred_check_branch
      %22 = sbr.rel (0) target = $region9
    $region8: #{tpu_custom_call.1} parent=1 // pred_region
      _
    $region9: #{tpu_custom_call.1} parent=1 // pred_fallthru
      _
    // Predicated region
    $region10: #{tpu_custom_call.1} parent=1 // pred_check
      _
    $region11: #{tpu_custom_call.1} parent=1 // pred_check_branch
      %24 = sbr.rel (0) target = $region13
    $region12: #{tpu_custom_call.1} parent=1 // pred_region
      %25 = dma.done [#allocation3], 256
    $region13: #{tpu_custom_call.1} parent=1 // pred_fallthru
      _
    %v26 = vld [vmem:[#allocation2] sm:$0xff]
    %v27 = vld [vmem:[#allocation2 + $0x8] sm:$0xff]
    %v28 = vmul.f32 %v26, %v26
    %v29 = vmul.f32 %v27, %v27
    %vm30 = vcmask 261120
    %v31 = vsel %vm30, %v28, 0.0
    %32 = vadd.xlane.f32.xlu0 %v31
    %v33 = vpop.xlane.xlu0 %32
    %v34 = vsel %vm30, %v29, 0.0
    %35 = vadd.xlane.f32.xlu0 %v34
    %v36 = vpop.xlane.xlu0 %35
    %v37 = vrcp.pop 32.0
    %v38 = vmul.f32 %v33, %v37
    %v39 = vmul.f32 %v36, %v37
    %v40 = vadd.f32 %v38, 1e-05
    %v41 = vadd.f32 %v39, 1e-05
    %v42 = vrsqrt.pop %v40
    %v43 = vrsqrt.pop %v41
    %v44 = vmul.f32 %v26, %v42
    %v45 = vmul.f32 %v27, %v43
    %v46 = vld [vmem:[%s1] sm:$0x1]
    %v48 = vlaneseq
    %v49 = vshrl.u32 %v48, 7
    %v50 = vsub.s32 0, %v49
    %v51 = vrot.slane %v46, %v50
    %v53 = vmul.f32 %v44, %v51
    %v54 = vmul.f32 %v45, %v51
    %55 = vst.msk [vmem:[#allocation5] sm:$0xff] %vm30, %v53
    %56 = vst.msk [vmem:[#allocation5 + $0x8] sm:$0xff] %vm30, %v54
    // Predicated region
    $region14: #{tpu_custom_call.1} parent=1 // pred_check
      _
    $region15: #{tpu_custom_call.1} parent=1 // pred_check_branch
      %58 = sbr.rel (0) target = $region17
    $region16: #{tpu_custom_call.1} parent=1 // pred_region
      %s60 = ssub.s32 256, 256
      %61 = vsyncadd [#allocation4], %s60
      %s62 = sshll.u32 [#allocation5], 4
      %s63 = int_to_ptr.vmem [resolvable:$true] %s62
      %68 = dma.vmem_to_hbm [thread:$0]  %s63, 256, %s2, [#allocation4], 128, 128, 8
    $region17: #{tpu_custom_call.1} parent=1 // pred_fallthru
      _
    // Predicated region
    $region18: #{tpu_custom_call.1} parent=1 // pred_check
      _
    $region19: #{tpu_custom_call.1} parent=1 // pred_check_branch
      %70 = sbr.rel (0) target = $region21
    $region20: #{tpu_custom_call.1} parent=1 // pred_region
      %71 = dma.done [#allocation4], 256
    $region21: #{tpu_custom_call.1} parent=1 // pred_fallthru
      _
    %72 = vsyncpa [#allocation3], 1
    %73 = vsyncpa [#allocation4], 1

</llo_original>
